<compile_context>
chip_gen: v6e
topology: v6e:2x2x1
jax: 0.10.0
libtpu: 0.0.40
codegen_flags: <defaults>
</compile_context>

<pallas_src>
import jax
import jax.numpy as jnp
from jax.experimental import pallas as pl
from jax.experimental.pallas import tpu as pltpu

_LANE = 128
_SUBLANE = 8
_BLOCK_BYTES = 1 << 20          # ~1 MiB per input block (x2 in, x2 out buffers)
_LANE_CAP = 2048                # max lanes per block


def _round_up(x, m):
    return (x + m - 1) // m * m


def _pick_tile(full, quantum, cap):
    """Largest multiple of `quantum` that divides `full`, capped at `cap`.

    Precondition: full % quantum == 0.
    """
    t = min(full, max(quantum, cap - cap % quantum))
    t -= t % quantum
    t = max(t, quantum)
    while full % t != 0:
        t -= quantum
    return t


def _copy_kernel(x_ref, o_ref):
    # One (r_blk, n_blk) slab per grid step: a full, unmasked VMEM->HBM tile
    # writeback when the shape is (8,128)-aligned.
    o_ref[...] = x_ref[...]


def merge_temporal_dim_reshape(x_seq):
    """Pure-metadata reference: flatten(0,1) as a jnp.reshape (free in XLA)."""
    return jnp.reshape(x_seq, (x_seq.shape[0] * x_seq.shape[1],) + x_seq.shape[2:])


def merge_temporal_dim(x_seq):
    """Pallas equivalent of MergeTemporalDim.forward: flatten(0,1).contiguous().

    x_seq: (T, B, *feat) -> returns (T*B, *feat), same dtype, contiguous copy
    materialized by a tiled Pallas copy kernel.
    """
    x = jnp.asarray(x_seq)
    assert x.ndim >= 2, "MergeTemporalDim expects at least (T, B, ...)"
    T, B = x.shape[0], x.shape[1]
    rest = x.shape[2:]
    N = 1
    for d in rest:
        N *= int(d)
    N = max(N, 1)
    M = T * B
    itemsize = jnp.dtype(x.dtype).itemsize

    # flatten(0,1) + feature flatten: metadata-only reshape in the wrapper.
    x2 = x.reshape(M, N)

    # --- lane (last-dim) tile: full lanes whenever N is 128-aligned ---
    if N % _LANE == 0:
        n_blk = _pick_tile(N, _LANE, _LANE_CAP)
    else:
        n_blk = N                                   # full-dim block (always legal)

    # --- sublane (row) tile: multiple of 8 dividing the row count ---
    row_cap = max(_SUBLANE, _BLOCK_BYTES // max(n_blk * itemsize, 1))
    M_pad = M
    if M % _SUBLANE == 0:
        r_blk = _pick_tile(M, _SUBLANE, row_cap)
    elif M <= row_cap:
        r_blk = M                                   # small: one full-row block
    else:
        # Large, misaligned row count: pad rows to a multiple of 8 so blocks
        # stay sublane-dense and VMEM-bounded; padding is sliced off below.
        M_pad = _round_up(M, _SUBLANE)
        x2 = jnp.pad(x2, ((0, M_pad - M), (0, 0)))
        r_blk = _pick_tile(M_pad, _SUBLANE, row_cap)

    grid = (M_pad // r_blk, N // n_blk)

    out = pl.pallas_call(
        _copy_kernel,
        out_shape=jax.ShapeDtypeStruct((M_pad, N), x.dtype),
        grid_spec=pltpu.PrefetchScalarGridSpec(
            num_scalar_prefetch=0,
            grid=grid,
            in_specs=[pl.BlockSpec((r_blk, n_blk), lambda i, j: (i, j))],
            out_specs=pl.BlockSpec((r_blk, n_blk), lambda i, j: (i, j)),
        ),
        compiler_params=pltpu.CompilerParams(
            dimension_semantics=("parallel", "parallel"),
            vmem_limit_bytes=32 * 1024 * 1024,
        ),
    )(x2)

    if M_pad != M:
        out = out[:M]
    return out.reshape((M,) + rest)


if __name__ == "__main__":
    key = jax.random.PRNGKey(0)
    k1, k2, k3 = jax.random.split(key, 3)

    # --- 5-D input (T, B, C, H, W), lane-aligned feature slab ---
    T, B, C, H, W = 8, 2, 4, 16, 16
    x1 = jax.random.normal(k1, (T, B, C, H, W), jnp.float32)
    out1 = jax.block_until_ready(merge_temporal_dim(x1))
    ref1 = merge_temporal_dim_reshape(x1)
    assert out1.shape == (T * B, C, H, W)
    assert out1.dtype == x1.dtype
    assert jnp.array_equal(out1, ref1), "5D merge mismatch"

    # --- 3-D input with a wide feature dim: exercises a multi-block grid ---
    T2, B2, F2 = 4, 8, 8192
    x2 = jax.random.normal(k2, (T2, B2, F2), jnp.float32)
    out2 = jax.block_until_ready(merge_temporal_dim(x2))
    assert out2.shape == (T2 * B2, F2)
    assert jnp.array_equal(out2, merge_temporal_dim_reshape(x2)), "3D merge mismatch"

    # same case in bfloat16 (halves copy traffic; copy is bit-exact)
    x2b = x2.astype(jnp.bfloat16)
    out2b = jax.block_until_ready(merge_temporal_dim(x2b))
    assert out2b.dtype == jnp.bfloat16
    assert jnp.array_equal(out2b, merge_temporal_dim_reshape(x2b)), "bf16 merge mismatch"

    # --- non-(8,128)-aligned shapes: full-dim block fallback path ---
    T3, B3, F3 = 5, 3, 200
    x3 = jax.random.normal(k3, (T3, B3, F3), jnp.float32)
    out3 = jax.block_until_ready(merge_temporal_dim(x3))
    assert out3.shape == (T3 * B3, F3)
    assert jnp.array_equal(out3, merge_temporal_dim_reshape(x3)), "unaligned merge mismatch"

    print("KERNEL_OK")
</pallas_src>

<mosaic_0001>
module attributes {stable_mosaic.version = 11 : i64} {
  func.func @_copy_kernel(%arg0: i32, %arg1: i32, %arg2: memref<16x1024xf32, #tpu.memory_space<vmem>>, %arg3: memref<16x1024xf32, #tpu.memory_space<vmem>>) attributes {dimension_semantics = [#tpu.dimension_semantics<parallel>, #tpu.dimension_semantics<parallel>], iteration_bounds = array<i64: 1, 1>, scalar_prefetch = 0 : i64, scratch_operands = 0 : i64, tpu.core_type = #tpu.core_type<tc>, window_params = [{transform_indices = @transform_0, window_bounds = array<i64: 16, 1024>}, {transform_indices = @transform_1, window_bounds = array<i64: 16, 1024>}]} {
    %c0 = arith.constant 0 : index
    %c0_0 = arith.constant 0 : index
    %0 = vector.load %arg2[%c0, %c0_0] : memref<16x1024xf32, #tpu.memory_space<vmem>>, vector<16x1024xf32>
    %c0_1 = arith.constant 0 : index
    %c0_2 = arith.constant 0 : index
    %1 = vector.load %arg3[%c0_1, %c0_2] : memref<16x1024xf32, #tpu.memory_space<vmem>>, vector<16x1024xf32>
    tpu.vector_store %arg3[%c0_1, %c0_2], %0 {strides = array<i32>} : memref<16x1024xf32, #tpu.memory_space<vmem>>, vector<16x1024xf32>,
    return
  }
  func.func @transform_0(%arg0: i32, %arg1: i32) -> (i32, i32) {
    %c0_i32 = arith.constant 0 : i32
    return %arg0, %arg1 : i32, i32
  }
  func.func @transform_1(%arg0: i32, %arg1: i32) -> (i32, i32) {
    %c0_i32 = arith.constant 0 : i32
    return %arg0, %arg1 : i32, i32
  }
}

</mosaic_0001>

<llo_original>
// kernel: tpu_custom_call.1
$region0: #{tpu_custom_call.1}
  #allocation0 [shape = 'u32[]', space=smem, size = 0x4, offset = 0x4, fixed_abs, tag = 'smem constant byte address 0x4 - core index']
  #allocation1 [shape = 'u32[144,128]{1,0:T(1,128)}', space=vmem, size = 0x12000, scoped, tag = 'internal scratch']
  %s0 = inlined_call_operand.hbm [shape: f32[16,1024], index: 0, kind: input, shape index: {}]
  %s1 = inlined_call_operand.hbm [shape: f32[16,1024], index: 1, kind: output, shape index: {}]
  %s2 = sld [smem:[#allocation0]]
  $region18: #{tpu_custom_call.1} parent=0
    _
  %s4 = ssub.s32 1, %s2
  %s5 = scalar_select 0, %s4, %s2
  $region1: #{tpu_custom_call.1} parent=0
    #allocation2 [shape = 'u8[65536]{0}', space=vmem, size = 0x10000, scoped, tag = 'input window, operand 0, single buffered']
    #allocation3 [shape = 's32[1]{0}', space=sflag, size = 0x4, scoped, tag = 'scoped memory for tpu_custom_call.1']
    #allocation4 [shape = 's32[1]{0}', space=sflag, size = 0x4, scoped, tag = 'scoped memory for tpu_custom_call.1']
    #allocation5 [shape = 'u8[65536]{0}', space=vmem, size = 0x10000, scoped, tag = 'output window, operand 0, single buffered']
    %6 = vsyncpa [#allocation3], 0
    %7 = vsyncpa [#allocation4], 0
    // Predicated region
    $region2: #{tpu_custom_call.1} parent=1 // pred_check
      _
    $region3: #{tpu_custom_call.1} parent=1 // pred_check_branch
      %9 = sbr.rel (0) target = $region5
    $region4: #{tpu_custom_call.1} parent=1 // pred_region
      %s11 = ssub.s32 2048, 2048
      %12 = vsyncadd [#allocation3], %s11
      %s13 = sshll.u32 [#allocation2], 4
      %s14 = int_to_ptr.vmem [resolvable:$true] %s13
      %19 = dma.hbm_to_vmem [thread:$0]  %s0, 2048, %s14, [#allocation3], 1024, 1024, 64
    $region5: #{tpu_custom_call.1} parent=1 // pred_fallthru
      _
    // Predicated region
    $region6: #{tpu_custom_call.1} parent=1 // pred_check
      _
    $region7: #{tpu_custom_call.1} parent=1 // pred_check_branch
      %21 = sbr.rel (0) target = $region9
    $region8: #{tpu_custom_call.1} parent=1 // pred_region
      %22 = dma.done [#allocation3], 2048
    $region9: #{tpu_custom_call.1} parent=1 // pred_fallthru
      _
    %v23 = vld [vmem:[#allocation2] sm:$0xff]
    %v24 = vld [vmem:[#allocation2 + $0x8] sm:$0xff]
    %v25 = vld [vmem:[#allocation2 + $0x10] sm:$0xff]
    %v26 = vld [vmem:[#allocation2 + $0x18] sm:$0xff]
    %v27 = vld [vmem:[#allocation2 + $0x20] sm:$0xff]
    %v28 = vld [vmem:[#allocation2 + $0x28] sm:$0xff]
    %v29 = vld [vmem:[#allocation2 + $0x30] sm:$0xff]
    %v30 = vld [vmem:[#allocation2 + $0x38] sm:$0xff]
    %v31 = vld [vmem:[#allocation2 + $0x40] sm:$0xff]
    %v32 = vld [vmem:[#allocation2 + $0x48] sm:$0xff]
    %v33 = vld [vmem:[#allocation2 + $0x50] sm:$0xff]
    %v34 = vld [vmem:[#allocation2 + $0x58] sm:$0xff]
    %v35 = vld [vmem:[#allocation2 + $0x60] sm:$0xff]
    %v36 = vld [vmem:[#allocation2 + $0x68] sm:$0xff]
    %v37 = vld [vmem:[#allocation2 + $0x70] sm:$0xff]
    %v38 = vld [vmem:[#allocation2 + $0x78] sm:$0xff]
    %39 = vst [vmem:[#allocation5] sm:$0xff] %v23
    %40 = vst [vmem:[#allocation5 + $0x8] sm:$0xff] %v24
    %41 = vst [vmem:[#allocation5 + $0x10] sm:$0xff] %v25
    %42 = vst [vmem:[#allocation5 + $0x18] sm:$0xff] %v26
    %43 = vst [vmem:[#allocation5 + $0x20] sm:$0xff] %v27
    %44 = vst [vmem:[#allocation5 + $0x28] sm:$0xff] %v28
    %45 = vst [vmem:[#allocation5 + $0x30] sm:$0xff] %v29
    %46 = vst [vmem:[#allocation5 + $0x38] sm:$0xff] %v30
    %47 = vst [vmem:[#allocation5 + $0x40] sm:$0xff] %v31
    %48 = vst [vmem:[#allocation5 + $0x48] sm:$0xff] %v32
    %49 = vst [vmem:[#allocation5 + $0x50] sm:$0xff] %v33
    %50 = vst [vmem:[#allocation5 + $0x58] sm:$0xff] %v34
    %51 = vst [vmem:[#allocation5 + $0x60] sm:$0xff] %v35
    %52 = vst [vmem:[#allocation5 + $0x68] sm:$0xff] %v36
    %53 = vst [vmem:[#allocation5 + $0x70] sm:$0xff] %v37
    %54 = vst [vmem:[#allocation5 + $0x78] sm:$0xff] %v38
    // Predicated region
    $region10: #{tpu_custom_call.1} parent=1 // pred_check
      _
    $region11: #{tpu_custom_call.1} parent=1 // pred_check_branch
      %56 = sbr.rel (0) target = $region13
    $region12: #{tpu_custom_call.1} parent=1 // pred_region
      %s58 = ssub.s32 2048, 2048
      %59 = vsyncadd [#allocation4], %s58
      %s60 = sshll.u32 [#allocation5], 4
      %s61 = int_to_ptr.vmem [resolvable:$true] %s60
      %66 = dma.vmem_to_hbm [thread:$0]  %s61, 2048, %s1, [#allocation4], 1024, 1024, 64
    $region13: #{tpu_custom_call.1} parent=1 // pred_fallthru
      _
    // Predicated region
    $region14: #{tpu_custom_call.1} parent=1 // pred_check
      _
    $region15: #{tpu_custom_call.1} parent=1 // pred_check_branch
      %68 = sbr.rel (0) target = $region17
    $region16: #{tpu_custom_call.1} parent=1 // pred_region
      %69 = dma.done [#allocation4], 2048
    $region17: #{tpu_custom_call.1} parent=1 // pred_fallthru
      _
    %70 = vsyncpa [#allocation3], 1
    %71 = vsyncpa [#allocation4], 1

</llo_original>
